<compile_context>
chip_gen: v6e
topology: v6e:2x2x1
jax: 0.10.0
libtpu: 0.0.40
codegen_flags: <defaults>
</compile_context>

<pallas_src>
import jax
import jax.numpy as jnp
from jax.experimental import pallas as pl
from jax.experimental.pallas import tpu as pltpu


# --------------------------------------------------------------------------
# Kernel
# --------------------------------------------------------------------------
def _atom_encoder_kernel(x_ref, emb_ref, out_ref):
    # x_ref  : [tile_n, F]          int32 local (non-offset) indices, in [0, V)
    # emb_ref: [F * vpad, H_pad]    fused, zero-padded embedding table (resident)
    # out_ref: [tile_n, H_pad]      float32
    tile_n, num_feat = x_ref.shape
    vpad = emb_ref.shape[0] // num_feat          # 128 for V=100

    x = x_ref[...]                               # (tile_n, F) int32

    # Per-feature 128-wide one-hot slices, each written exactly once, then
    # concatenated lane-wise into the fused (tile_n, F*vpad) LHS.  Valid
    # indices (< V <= vpad) never touch a table pad row, and the pad rows are
    # zero anyway.
    lane_iota = jax.lax.broadcasted_iota(jnp.int32, (tile_n, vpad), 1)
    slices = []
    for i in range(num_feat):                    # static F <= 9
        idx_col = x[:, i:i + 1]                  # (tile_n, 1)
        slices.append((idx_col == lane_iota).astype(emb_ref.dtype))
    one_hot = jnp.concatenate(slices, axis=1)    # (tile_n, F*vpad)

    # Single MXU contraction; accumulation over K happens inside the MXU,
    # result accumulated/popped once into the lane-dense output tile.
    out_ref[...] = jnp.dot(one_hot, emb_ref[...],
                           preferred_element_type=jnp.float32)


# --------------------------------------------------------------------------
# Wrapper
# --------------------------------------------------------------------------
def _default_emb_dtype():
    """bf16 on chips with a bf16 VPU (v6e / v7x), f32 otherwise (v5e and older)."""
    try:
        kind = jax.devices()[0].device_kind.lower()
    except Exception:
        return jnp.float32
    for old in ("v2", "v3", "v4", "v5"):
        if old in kind:
            return jnp.float32
    return jnp.bfloat16


def prepare_tables(emb_tables, num_features, emb_dtype=None):
    """Fuse + pad the per-feature tables.  Hoist this to model init.

    emb_tables: [F_tab, V, H] float32
    Returns (emb_flat [F*vpad, H_pad], vpad, hpad).
    """
    f_tab, v, h = emb_tables.shape
    assert num_features <= f_tab, "more index columns than embedding tables"
    vpad = pl.cdiv(v, 128) * 128                 # lane-align each vocab slice
    hpad = pl.cdiv(h, 128) * 128                 # lane-dense output / MXU N dim
    emb = emb_tables[:num_features]
    emb = jnp.pad(emb, ((0, 0), (0, vpad - v), (0, hpad - h)))
    emb_flat = emb.reshape(num_features * vpad, hpad)
    if emb_dtype is not None and emb_flat.dtype != emb_dtype:
        emb_flat = emb_flat.astype(emb_dtype)
    return emb_flat, vpad, hpad


def atom_encoder_prepared(x, emb_flat, *, tile_n=512):
    """Run the kernel on already-prepared (fused/padded) tables."""
    n, f = x.shape
    k, hpad = emb_flat.shape

    # Shrink the tile for small N so the grid has an even number (>= 2) of
    # steps — v7x has 2 TensorCores and "parallel" shards the node axis.
    tile_n = max(8, min(tile_n, pl.cdiv(pl.cdiv(n, 2), 8) * 8))
    n_pad = pl.cdiv(n, 2 * tile_n) * (2 * tile_n)

    x_i = x.astype(jnp.int32)
    if n_pad != n:
        # Pad rows reuse index 0; their outputs are sliced away by the caller.
        x_i = jnp.pad(x_i, ((0, n_pad - n), (0, 0)))

    grid = (n_pad // tile_n,)
    out = pl.pallas_call(
        _atom_encoder_kernel,
        out_shape=jax.ShapeDtypeStruct((n_pad, hpad), jnp.float32),
        grid_spec=pltpu.PrefetchScalarGridSpec(
            num_scalar_prefetch=0,
            grid=grid,
            in_specs=[
                # Index tile: last dim (F) equals the full array dim -> OK.
                pl.BlockSpec((tile_n, f), lambda b: (b, 0)),
                # Fused table resident in VMEM (<= ~576 KiB f32 / 288 KiB bf16).
                pl.BlockSpec((k, hpad), lambda b: (0, 0)),
            ],
            out_specs=pl.BlockSpec((tile_n, hpad), lambda b: (b, 0)),
        ),
        compiler_params=pltpu.CompilerParams(
            # Node axis is embarrassingly parallel -> shards across TCs on v7x.
            dimension_semantics=("parallel",),
        ),
    )(x_i, emb_flat)
    return out


def atom_encoder(x, emb_tables, *, tile_n=512, emb_dtype="auto"):
    """Sum of per-feature embedding lookups (AtomEncoder forward).

    x          : [N] or [N, F] integer indices in [0, V)
    emb_tables : [F_tab, V, H] float32 embedding tables (F <= F_tab)
    tile_n     : node-tile size (sweepable); auto-shrunk for small N.
    emb_dtype  : "auto" (bf16 on v6e/v7x, f32 on v5e), None / jnp.float32 for
                 bit-exact f32, or an explicit dtype.
    """
    if x.ndim == 1:
        x = x[:, None]
    n, f = x.shape
    h = emb_tables.shape[-1]
    if isinstance(emb_dtype, str) and emb_dtype == "auto":
        emb_dtype = _default_emb_dtype()
    emb_flat, _, _ = prepare_tables(emb_tables, f, emb_dtype)
    out = atom_encoder_prepared(x, emb_flat, tile_n=tile_n)
    return out[:n, :h]


# --------------------------------------------------------------------------
# Self-test
# --------------------------------------------------------------------------
if __name__ == "__main__":
    key = jax.random.PRNGKey(0)
    k_emb, k_idx = jax.random.split(key)

    num_embeddings = 9      # module hard-codes 9 embedding tables
    vocab = 100             # torch.nn.Embedding(100, hidden_channels)
    hidden = 32
    n_nodes = 8
    n_feats = 9             # one index column per embedding used

    # Deterministic synthetic parameters (torch Embedding init is N(0, 1)).
    emb_tables = jax.random.normal(
        k_emb, (num_embeddings, vocab, hidden), dtype=jnp.float32)
    x = jax.random.randint(k_idx, (n_nodes, n_feats), 0, vocab, dtype=jnp.int32)

    # Pure-JAX reference: sum of per-feature embedding lookups.
    ref = jnp.zeros((n_nodes, hidden), jnp.float32)
    for i in range(n_feats):
        ref = ref + emb_tables[i][x[:, i]]

    # 1) Bit-exact f32 path.
    out_f32 = jax.block_until_ready(
        atom_encoder(x, emb_tables, emb_dtype=jnp.float32))
    assert out_f32.shape == (n_nodes, hidden)
    assert jnp.allclose(out_f32, ref, atol=1e-5, rtol=1e-5)

    # 2) Auto dtype path (bf16 on v6e/v7x): only table-rounding error expected.
    out_auto = jax.block_until_ready(atom_encoder(x, emb_tables))
    assert out_auto.shape == (n_nodes, hidden)
    assert jnp.allclose(out_auto, ref, atol=0.1, rtol=0.1)

    # 3) 1-D input path (x.dim() == 1 branch of the module).
    x1d = x[:, 0]
    out1d = jax.block_until_ready(
        atom_encoder(x1d, emb_tables, emb_dtype=jnp.float32))
    assert jnp.allclose(out1d, emb_tables[0][x1d], atol=1e-5, rtol=1e-5)

    print("KERNEL_OK")
</pallas_src>

<mosaic_0001>
module attributes {stable_mosaic.version = 11 : i64} {
  func.func @_atom_encoder_kernel(%arg0: i32, %arg1: memref<8x9xi32, #tpu.memory_space<vmem>>, %arg2: memref<1152x128xf32, #tpu.memory_space<vmem>>, %arg3: memref<8x128xf32, #tpu.memory_space<vmem>>) attributes {dimension_semantics = [#tpu.dimension_semantics<parallel>], iteration_bounds = array<i64: 2>, scalar_prefetch = 0 : i64, scratch_operands = 0 : i64, tpu.core_type = #tpu.core_type<tc>, window_params = [{transform_indices = @transform_0, window_bounds = array<i64: 8, 9>}, {pipeline_mode = #tpu.pipeline_mode<synchronous>, transform_indices = @transform_1, window_bounds = array<i64: 1152, 128>}, {transform_indices = @transform_2, window_bounds = array<i64: 8, 128>}]} {
    %c0 = arith.constant 0 : index
    %c0_0 = arith.constant 0 : index
    %0 = vector.load %arg1[%c0, %c0_0] : memref<8x9xi32, #tpu.memory_space<vmem>>, vector<8x9xi32>
    %1 = tpu.iota {dimensions = array<i32: 1>} : vector<8x128xi32>
    %2 = vector.extract_strided_slice %0 {offsets = [0, 0], sizes = [8, 1], strides = [1, 1]} : vector<8x9xi32> to vector<8x1xi32>
    %3 = vector.broadcast %2 : vector<8x1xi32> to vector<8x128xi32>
    %4 = arith.cmpi eq, %3, %1 : vector<8x128xi32>
    %5 = arith.extui %4 : vector<8x128xi1> to vector<8x128xi32>
    %6 = arith.sitofp %5 : vector<8x128xi32> to vector<8x128xf32>
    %7 = vector.extract_strided_slice %0 {offsets = [0, 1], sizes = [8, 1], strides = [1, 1]} : vector<8x9xi32> to vector<8x1xi32>
    %8 = vector.broadcast %7 : vector<8x1xi32> to vector<8x128xi32>
    %9 = arith.cmpi eq, %8, %1 : vector<8x128xi32>
    %10 = arith.extui %9 : vector<8x128xi1> to vector<8x128xi32>
    %11 = arith.sitofp %10 : vector<8x128xi32> to vector<8x128xf32>
    %12 = vector.extract_strided_slice %0 {offsets = [0, 2], sizes = [8, 1], strides = [1, 1]} : vector<8x9xi32> to vector<8x1xi32>
    %13 = vector.broadcast %12 : vector<8x1xi32> to vector<8x128xi32>
    %14 = arith.cmpi eq, %13, %1 : vector<8x128xi32>
    %15 = arith.extui %14 : vector<8x128xi1> to vector<8x128xi32>
    %16 = arith.sitofp %15 : vector<8x128xi32> to vector<8x128xf32>
    %17 = vector.extract_strided_slice %0 {offsets = [0, 3], sizes = [8, 1], strides = [1, 1]} : vector<8x9xi32> to vector<8x1xi32>
    %18 = vector.broadcast %17 : vector<8x1xi32> to vector<8x128xi32>
    %19 = arith.cmpi eq, %18, %1 : vector<8x128xi32>
    %20 = arith.extui %19 : vector<8x128xi1> to vector<8x128xi32>
    %21 = arith.sitofp %20 : vector<8x128xi32> to vector<8x128xf32>
    %22 = vector.extract_strided_slice %0 {offsets = [0, 4], sizes = [8, 1], strides = [1, 1]} : vector<8x9xi32> to vector<8x1xi32>
    %23 = vector.broadcast %22 : vector<8x1xi32> to vector<8x128xi32>
    %24 = arith.cmpi eq, %23, %1 : vector<8x128xi32>
    %25 = arith.extui %24 : vector<8x128xi1> to vector<8x128xi32>
    %26 = arith.sitofp %25 : vector<8x128xi32> to vector<8x128xf32>
    %27 = vector.extract_strided_slice %0 {offsets = [0, 5], sizes = [8, 1], strides = [1, 1]} : vector<8x9xi32> to vector<8x1xi32>
    %28 = vector.broadcast %27 : vector<8x1xi32> to vector<8x128xi32>
    %29 = arith.cmpi eq, %28, %1 : vector<8x128xi32>
    %30 = arith.extui %29 : vector<8x128xi1> to vector<8x128xi32>
    %31 = arith.sitofp %30 : vector<8x128xi32> to vector<8x128xf32>
    %32 = vector.extract_strided_slice %0 {offsets = [0, 6], sizes = [8, 1], strides = [1, 1]} : vector<8x9xi32> to vector<8x1xi32>
    %33 = vector.broadcast %32 : vector<8x1xi32> to vector<8x128xi32>
    %34 = arith.cmpi eq, %33, %1 : vector<8x128xi32>
    %35 = arith.extui %34 : vector<8x128xi1> to vector<8x128xi32>
    %36 = arith.sitofp %35 : vector<8x128xi32> to vector<8x128xf32>
    %37 = vector.extract_strided_slice %0 {offsets = [0, 7], sizes = [8, 1], strides = [1, 1]} : vector<8x9xi32> to vector<8x1xi32>
    %38 = vector.broadcast %37 : vector<8x1xi32> to vector<8x128xi32>
    %39 = arith.cmpi eq, %38, %1 : vector<8x128xi32>
    %40 = arith.extui %39 : vector<8x128xi1> to vector<8x128xi32>
    %41 = arith.sitofp %40 : vector<8x128xi32> to vector<8x128xf32>
    %42 = vector.extract_strided_slice %0 {offsets = [0, 8], sizes = [8, 1], strides = [1, 1]} : vector<8x9xi32> to vector<8x1xi32>
    %43 = vector.broadcast %42 : vector<8x1xi32> to vector<8x128xi32>
    %44 = arith.cmpi eq, %43, %1 : vector<8x128xi32>
    %45 = arith.extui %44 : vector<8x128xi1> to vector<8x128xi32>
    %46 = arith.sitofp %45 : vector<8x128xi32> to vector<8x128xf32>
    %47 = tpu.concatenate %6, %11, %16, %21, %26, %31, %36, %41, %46 in 1 : vector<8x128xf32>, vector<8x128xf32>, vector<8x128xf32>, vector<8x128xf32>, vector<8x128xf32>, vector<8x128xf32>, vector<8x128xf32>, vector<8x128xf32>, vector<8x128xf32> -> vector<8x1152xf32>
    %c0_1 = arith.constant 0 : index
    %c0_2 = arith.constant 0 : index
    %48 = vector.load %arg2[%c0_1, %c0_2] : memref<1152x128xf32, #tpu.memory_space<vmem>>, vector<1152x128xf32>
    %cst = arith.constant dense<0.000000e+00> : vector<8x128xf32>
    %49 = tpu.matmul %47, %48, %cst {dimension_numbers = #tpu.dot_dimension_numbers<[1], [0], [0], [1], [0, 0, 1, 1], [], []>} : vector<8x1152xf32>, vector<1152x128xf32>, vector<8x128xf32> -> vector<8x128xf32>
    %c0_3 = arith.constant 0 : index
    %c0_4 = arith.constant 0 : index
    %50 = vector.load %arg3[%c0_3, %c0_4] : memref<8x128xf32, #tpu.memory_space<vmem>>, vector<8x128xf32>
    tpu.vector_store %arg3[%c0_3, %c0_4], %49 {strides = array<i32>} : memref<8x128xf32, #tpu.memory_space<vmem>>, vector<8x128xf32>,
    return
  }
  func.func @transform_0(%arg0: i32) -> (i32, i32) {
    %c0_i32 = arith.constant 0 : i32
    %c0_i32_0 = arith.constant 0 : i32
    return %arg0, %c0_i32 : i32, i32
  }
  func.func @transform_1(%arg0: i32) -> (i32, i32) {
    %c0_i32 = arith.constant 0 : i32
    %c0_i32_0 = arith.constant 0 : i32
    %c0_i32_1 = arith.constant 0 : i32
    return %c0_i32, %c0_i32_0 : i32, i32
  }
  func.func @transform_2(%arg0: i32) -> (i32, i32) {
    %c0_i32 = arith.constant 0 : i32
    %c0_i32_0 = arith.constant 0 : i32
    return %arg0, %c0_i32 : i32, i32
  }
}

</mosaic_0001>

<llo_original>
// kernel: tpu_custom_call.1
$region0: #{tpu_custom_call.1}
  #allocation0 [shape = 'u32[]', space=smem, size = 0x4, offset = 0x4, fixed_abs, tag = 'smem constant byte address 0x4 - core index']
  #allocation1 [shape = 'u32[144,128]{1,0:T(1,128)}', space=vmem, size = 0x12000, scoped, tag = 'internal scratch']
  %s0 = inlined_call_operand.hbm [shape: s32[16,9], index: 0, kind: input, shape index: {}]
  %s1 = inlined_call_operand.hbm [shape: f32[1152,128], index: 1, kind: input, shape index: {}]
  %s2 = inlined_call_operand.hbm [shape: f32[16,128], index: 2, kind: output, shape index: {}]
  %s3 = sld [smem:[#allocation0]]
  $region49: #{tpu_custom_call.1} parent=0
    _
  %s5 = ssub.s32 1, %s3
  %s6 = scalar_select 0, %s5, %s3
  $region1: #{tpu_custom_call.1} parent=0
    #allocation2 [shape = 'u8[8192]{0}', space=vmem, size = 0x2000, scoped, tag = 'input window, operand 0']
    #allocation3 [shape = 's32[2]{0}', space=sflag, size = 0x8, scoped, tag = 'scoped memory for tpu_custom_call.1']
    #allocation4 [shape = 's32[2]{0}', space=sflag, size = 0x8, scoped, tag = 'scoped memory for tpu_custom_call.1']
    #allocation5 [shape = 'u8[589824]{0}', space=vmem, size = 0x90000, scoped, tag = 'input window, operand 1, single buffered']
    #allocation6 [shape = 's32[1]{0}', space=sflag, size = 0x4, scoped, tag = 'scoped memory for tpu_custom_call.1']
    #allocation7 [shape = 'u8[8192]{0}', space=vmem, size = 0x2000, scoped, tag = 'output window, operand 0']
    %7 = vsyncpa [#allocation3], 0
    %s8 = scalar_lea.sflag [#allocation3], 1
    %9 = vsyncpa %s8, 0
    %10 = vsyncpa [#allocation6], 0
    %11 = vsyncpa [#allocation4], 0
    %s12 = scalar_lea.sflag [#allocation4], 1
    %13 = vsyncpa %s12, 0
    loop: start=0, step=1, limit=4
    $region2: #{tpu_custom_call.1} parent=1 // loop_pre_header
      _
    $region3: #{tpu_custom_call.1} parent=1 // loop_header
      %s15 = sphi 0, %s19
      %p16 = scmp.ge.s32.totalorder %s15, 4
      %s25 = sphi 0, %s27
      %s28 = sphi 0, %s25
      %s29 = sphi 0, %s28
      %s45 = sphi 0, %s29
      %s49 = sphi 0, %s49
      %s51 = sphi 0, %s49
      %s52 = sphi 0, %s51
      %s66 = sphi 0, %s52
      %s72 = sphi 0, %s74
      %s75 = sphi 0, %s72
      %s76 = sphi 0, %s75
      %s92 = sphi 0, %s76
    $region4: #{tpu_custom_call.1} parent=1 // loop_header_branch
      %18 = sbr.rel (%p16) target = $region8
    $region5: #{tpu_custom_call.1} parent=1 // loop_body
      %s20 = ssub.s32 %s15, 1
      %s21 = ssub.s32 %s15, 2
      %s22 = sadd.s32 %s15, 1
      %s23 = ssub.s32 %s15, %s22
      %p24 = scmp.eq.s32.totalorder %s23, 0
      %s26 = sadd.s32 %s25, 1
      %s27 = scalar_select %p24, %s25, %s26
      %p30 = pneg %p24
      %p31 = scmp.eq.s32.totalorder %s15, 1
      %p32 = por %p30, %p31
      %p33 = scmp.ne.s32.totalorder %s25, %s28
      %p34 = scmp.eq.s32.totalorder %s15, 0
      %p35 = por %p33, %p34
      %p36 = scmp.ne.s32.totalorder %s25, %s28
      %p37 = scmp.eq.s32.totalorder %s20, 1
      %p38 = por %p36, %p37
      %p39 = scmp.ne.s32.totalorder %s28, %s29
      %p40 = scmp.eq.s32.totalorder %s20, 0
      %p41 = por %p39, %p40
      %p42 = scmp.ne.s32.totalorder %s28, %s29
      %p43 = scmp.eq.s32.totalorder %s21, 1
      %p44 = por %p42, %p43
      %p46 = scmp.ne.s32.totalorder %s29, %s45
      %p47 = scmp.eq.s32.totalorder %s21, 0
      %p48 = por %p46, %p47
      %s50 = sadd.s32 %s49, 1
      %p53 = scmp.eq.s32.totalorder %s15, 1
      %p54 = scmp.ne.s32.totalorder %s49, %s51
      %p55 = scmp.eq.s32.totalorder %s15, 0
      %p56 = por %p54, %p55
      %p57 = scmp.ne.s32.totalorder %s49, %s51
      %p58 = scmp.eq.s32.totalorder %s20, 1
      %p59 = por %p57, %p58
      %p60 = scmp.ne.s32.totalorder %s51, %s52
      %p61 = scmp.eq.s32.totalorder %s20, 0
      %p62 = por %p60, %p61
      %p63 = scmp.ne.s32.totalorder %s51, %s52
      %p64 = scmp.eq.s32.totalorder %s21, 1
      %p65 = por %p63, %p64
      %p67 = scmp.ne.s32.totalorder %s52, %s66
      %p68 = scmp.eq.s32.totalorder %s21, 0
      %p69 = por %p67, %p68
      %s70 = ssub.s32 %s15, %s22
      %p71 = scmp.eq.s32.totalorder %s70, 0
      %s73 = sadd.s32 %s72, 1
      %s74 = scalar_select %p71, %s72, %s73
      %p77 = pneg %p71
      %p78 = scmp.eq.s32.totalorder %s15, 1
      %p79 = por %p77, %p78
      %p80 = scmp.ne.s32.totalorder %s72, %s75
      %p81 = scmp.eq.s32.totalorder %s15, 0
      %p82 = por %p80, %p81
      %p83 = scmp.ne.s32.totalorder %s72, %s75
      %p84 = scmp.eq.s32.totalorder %s20, 1
      %p85 = por %p83, %p84
      %p86 = scmp.ne.s32.totalorder %s75, %s76
      %p87 = scmp.eq.s32.totalorder %s20, 0
      %p88 = por %p86, %p87
      %p89 = scmp.ne.s32.totalorder %s75, %s76
      %p90 = scmp.eq.s32.totalorder %s21, 1
      %p91 = por %p89, %p90
      %p93 = scmp.ne.s32.totalorder %s76, %s92
      %p94 = scmp.eq.s32.totalorder %s21, 0
      %p95 = por %p93, %p94
      %p96 = scmp.le.s32.totalorder 1, %s15
      %p97 = scmp.lt.s32.totalorder %s15, 3
      %p98 = pnand %p96, %p97
      %p99 = pneg %p98
      // Predicated region
      $region9: #{tpu_custom_call.1} parent=5 // pred_check
        _
      $region10: #{tpu_custom_call.1} parent=5 // pred_check_branch
        %101 = sbr.rel (%p98) target = $region12
      $region11: #{tpu_custom_call.1} parent=5 // pred_region
        %s102 = ssub.s32 %s15, 1
        // Predicated region
        $region13: #{tpu_custom_call.1} parent=11 // pred_check
          %p103 = pneg %p62
        $region14: #{tpu_custom_call.1} parent=11 // pred_check_branch
          %105 = sbr.rel (%p103) target = $region16
        $region15: #{tpu_custom_call.1} parent=11 // pred_region
          %s107 = ssub.s32 18432, 18432
          %108 = vsyncadd [#allocation6], %s107
          %s109 = sshll.u32 [#allocation5], 4
          %s110 = int_to_ptr.vmem [resolvable:$true] %s109
          %115 = dma.hbm_to_vmem [thread:$0]  %s1, 18432, %s110, [#allocation6], 128, 128, 8
        $region16: #{tpu_custom_call.1} parent=11 // pred_fallthru
          _
      $region12: #{tpu_custom_call.1} parent=5 // pred_fallthru
        _
      %p116 = scmp.lt.s32.totalorder %s15, 2
      // Predicated region
      $region17: #{tpu_custom_call.1} parent=5 // pred_check
        %p117 = pneg %p116
      $region18: #{tpu_custom_call.1} parent=5 // pred_check_branch
        %119 = sbr.rel (%p117) target = $region20
      $region19: #{tpu_custom_call.1} parent=5 // pred_region
        // Predicated region
        $region21: #{tpu_custom_call.1} parent=19 // pred_check
          %p120 = pneg %p35
        $region22: #{tpu_custom_call.1} parent=19 // pred_check_branch
          %122 = sbr.rel (%p120) target = $region24
        $region23: #{tpu_custom_call.1} parent=19 // pred_region
          %s123 = sand.u32 %s25, 1
          %s124 = scalar_lea.sflag [#allocation3], %s123
          %s125 = sand.u32 %s25, 1
          %s126 = smul.addr %s125, 8
          %s127 = scalar_lea.vmem [#allocation2], %s126
          %s129 = ssub.s32 128, 128
          %130 = vsyncadd %s124, %s129
          %s131 = smul.addr %s15, 128
          %s132 = scalar_lea.hbm %s0, %s131
          %s134 = sshll.u32 %s127, 4
          %s135 = int_to_ptr.vmem [resolvable:$true] %s134
          %137 = dma.hbm_to_vmem [thread:$0]  %s132, 128, %s135, %s124
        $region24: #{tpu_custom_call.1} parent=19 // pred_fallthru
          _
      $region20: #{tpu_custom_call.1} parent=5 // pred_fallthru
        _
      %p138 = scmp.le.s32.totalorder 1, %s15
      %p139 = scmp.lt.s32.totalorder %s15, 3
      %p140 = pnand %p138, %p139
      %p141 = pneg %p140
      // Predicated region
      $region25: #{tpu_custom_call.1} parent=5 // pred_check
        _
      $region26: #{tpu_custom_call.1} parent=5 // pred_check_branch
        %143 = sbr.rel (%p140) target = $region28
      $region27: #{tpu_custom_call.1} parent=5 // pred_region
        %s144 = ssub.s32 %s15, 1
        %s145 = sand.u32 %s28, 1
        %s146 = scalar_lea.sflag [#allocation3], %s145
        %s147 = sand.u32 %s28, 1
        %s148 = smul.addr %s147, 8
        %s149 = scalar_lea.vmem [#allocation2], %s148
        // Predicated region
        $region29: #{tpu_custom_call.1} parent=27 // pred_check
          %p150 = pneg %p41
        $region30: #{tpu_custom_call.1} parent=27 // pred_check_branch
          %152 = sbr.rel (%p150) target = $region32
        $region31: #{tpu_custom_call.1} parent=27 // pred_region
          %153 = dma.done %s146, 128
        $region32: #{tpu_custom_call.1} parent=27 // pred_fallthru
          _
        // Predicated region
        $region33: #{tpu_custom_call.1} parent=27 // pred_check
          %p154 = pneg %p62
        $region34: #{tpu_custom_call.1} parent=27 // pred_check_branch
          %156 = sbr.rel (%p154) target = $region36
        $region35: #{tpu_custom_call.1} parent=27 // pred_region
          %157 = dma.done [#allocation6], 18432
        $region36: #{tpu_custom_call.1} parent=27 // pred_fallthru
          _
        %s158 = sand.u32 %s28, 1
        %s159 = scalar_lea.sflag [#allocation3], %s158
        %s160 = sand.u32 %s28, 1
        %s161 = smul.addr %s160, 8
        %s162 = scalar_lea.vmem [#allocation2], %s161
        %p163 = pneg %p41
        %p164 = pneg %p38
        %p165 = pneg %p62
        %p166 = pneg %p59
        %p167 = pneg %p88
        %p168 = pneg %p85
        %s169 = sand.u32 %s75, 1
        %s170 = scalar_lea.sflag [#allocation4], %s169
        %s171 = sand.u32 %s75, 1
        %s172 = smul.addr %s171, 8
        %s173 = scalar_lea.vmem [#allocation7], %s172
        %v174 = vld [vmem:[%s149] sm:$0xff]
        %v175 = vlaneseq
        %v176 = vand.u32 %v175, 127
        %177 = vset.pattern.permute.xlu0 0
        %178 = vperm.xlu0 %177, %v174
        %v179 = vpop.permute.xlu0 %178
        %vm180 = vcmp.eq.s32.totalorder %v179, %v176
        %v181 = vsel %vm180, 1, 0
        %v182 = vcvt.s32.f32 %v181
        %183 = vset.pattern.permute.xlu0 1
        %184 = vperm.xlu0 %183, %v174
        %v185 = vpop.permute.xlu0 %184
        %vm186 = vcmp.eq.s32.totalorder %v185, %v176
        %v187 = vsel %vm186, 1, 0
        %v188 = vcvt.s32.f32 %v187
        %189 = vset.pattern.permute.xlu0 2
        %190 = vperm.xlu0 %189, %v174
        %v191 = vpop.permute.xlu0 %190
        %vm192 = vcmp.eq.s32.totalorder %v191, %v176
        %v193 = vsel %vm192, 1, 0
        %v194 = vcvt.s32.f32 %v193
        %195 = vset.pattern.permute.xlu0 3
        %196 = vperm.xlu0 %195, %v174
        %v197 = vpop.permute.xlu0 %196
        %vm198 = vcmp.eq.s32.totalorder %v197, %v176
        %v199 = vsel %vm198, 1, 0
        %v200 = vcvt.s32.f32 %v199
        %201 = vset.pattern.permute.xlu0 4
        %202 = vperm.xlu0 %201, %v174
        %v203 = vpop.permute.xlu0 %202
        %vm204 = vcmp.eq.s32.totalorder %v203, %v176
        %v205 = vsel %vm204, 1, 0
        %v206 = vcvt.s32.f32 %v205
        %207 = vset.pattern.permute.xlu0 5
        %208 = vperm.xlu0 %207, %v174
        %v209 = vpop.permute.xlu0 %208
        %vm210 = vcmp.eq.s32.totalorder %v209, %v176
        %v211 = vsel %vm210, 1, 0
        %v212 = vcvt.s32.f32 %v211
        %213 = vset.pattern.permute.xlu0 6
        %214 = vperm.xlu0 %213, %v174
        %v215 = vpop.permute.xlu0 %214
        %vm216 = vcmp.eq.s32.totalorder %v215, %v176
        %v217 = vsel %vm216, 1, 0
        %v218 = vcvt.s32.f32 %v217
        %219 = vset.pattern.permute.xlu0 7
        %220 = vperm.xlu0 %219, %v174
        %v221 = vpop.permute.xlu0 %220
        %vm222 = vcmp.eq.s32.totalorder %v221, %v176
        %v223 = vsel %vm222, 1, 0
        %v224 = vcvt.s32.f32 %v223
        %225 = vset.pattern.permute.xlu0 8
        %226 = vperm.xlu0 %225, %v174
        %v227 = vpop.permute.xlu0 %226
        %vm228 = vcmp.eq.s32.totalorder %v227, %v176
        %v229 = vsel %vm228, 1, 0
        %v230 = vcvt.s32.f32 %v229
        %v231 = vld [vmem:[#allocation5] sm:$0xff]
        %v232 = vld [vmem:[#allocation5 + $0x8] sm:$0xff]
        %v233 = vld [vmem:[#allocation5 + $0x10] sm:$0xff]
        %v234 = vld [vmem:[#allocation5 + $0x18] sm:$0xff]
        %v235 = vld [vmem:[#allocation5 + $0x20] sm:$0xff]
        %v236 = vld [vmem:[#allocation5 + $0x28] sm:$0xff]
        %v237 = vld [vmem:[#allocation5 + $0x30] sm:$0xff]
        %v238 = vld [vmem:[#allocation5 + $0x38] sm:$0xff]
        %v239 = vld [vmem:[#allocation5 + $0x40] sm:$0xff]
        %v240 = vld [vmem:[#allocation5 + $0x48] sm:$0xff]
        %v241 = vld [vmem:[#allocation5 + $0x50] sm:$0xff]
        %v242 = vld [vmem:[#allocation5 + $0x58] sm:$0xff]
        %v243 = vld [vmem:[#allocation5 + $0x60] sm:$0xff]
        %v244 = vld [vmem:[#allocation5 + $0x68] sm:$0xff]
        %v245 = vld [vmem:[#allocation5 + $0x70] sm:$0xff]
        %v246 = vld [vmem:[#allocation5 + $0x78] sm:$0xff]
        %v247 = vld [vmem:[#allocation5 + $0x80] sm:$0xff]
        %v248 = vld [vmem:[#allocation5 + $0x88] sm:$0xff]
        %v249 = vld [vmem:[#allocation5 + $0x90] sm:$0xff]
        %v250 = vld [vmem:[#allocation5 + $0x98] sm:$0xff]
        %v251 = vld [vmem:[#allocation5 + $0xa0] sm:$0xff]
        %v252 = vld [vmem:[#allocation5 + $0xa8] sm:$0xff]
        %v253 = vld [vmem:[#allocation5 + $0xb0] sm:$0xff]
        %v254 = vld [vmem:[#allocation5 + $0xb8] sm:$0xff]
        %v255 = vld [vmem:[#allocation5 + $0xc0] sm:$0xff]
        %v256 = vld [vmem:[#allocation5 + $0xc8] sm:$0xff]
        %v257 = vld [vmem:[#allocation5 + $0xd0] sm:$0xff]
        %v258 = vld [vmem:[#allocation5 + $0xd8] sm:$0xff]
        %v259 = vld [vmem:[#allocation5 + $0xe0] sm:$0xff]
        %v260 = vld [vmem:[#allocation5 + $0xe8] sm:$0xff]
        %v261 = vld [vmem:[#allocation5 + $0xf0] sm:$0xff]
        %v262 = vld [vmem:[#allocation5 + $0xf8] sm:$0xff]
        %v263 = vld [vmem:[#allocation5 + $0x100] sm:$0xff]
        %v264 = vld [vmem:[#allocation5 + $0x108] sm:$0xff]
        %v265 = vld [vmem:[#allocation5 + $0x110] sm:$0xff]
        %v266 = vld [vmem:[#allocation5 + $0x118] sm:$0xff]
        %v267 = vld [vmem:[#allocation5 + $0x120] sm:$0xff]
        %v268 = vld [vmem:[#allocation5 + $0x128] sm:$0xff]
        %v269 = vld [vmem:[#allocation5 + $0x130] sm:$0xff]
        %v270 = vld [vmem:[#allocation5 + $0x138] sm:$0xff]
        %v271 = vld [vmem:[#allocation5 + $0x140] sm:$0xff]
        %v272 = vld [vmem:[#allocation5 + $0x148] sm:$0xff]
        %v273 = vld [vmem:[#allocation5 + $0x150] sm:$0xff]
        %v274 = vld [vmem:[#allocation5 + $0x158] sm:$0xff]
        %v275 = vld [vmem:[#allocation5 + $0x160] sm:$0xff]
        %v276 = vld [vmem:[#allocation5 + $0x168] sm:$0xff]
        %v277 = vld [vmem:[#allocation5 + $0x170] sm:$0xff]
        %v278 = vld [vmem:[#allocation5 + $0x178] sm:$0xff]
        %v279 = vld [vmem:[#allocation5 + $0x180] sm:$0xff]
        %v280 = vld [vmem:[#allocation5 + $0x188] sm:$0xff]
        %v281 = vld [vmem:[#allocation5 + $0x190] sm:$0xff]
        %v282 = vld [vmem:[#allocation5 + $0x198] sm:$0xff]
        %v283 = vld [vmem:[#allocation5 + $0x1a0] sm:$0xff]
        %v284 = vld [vmem:[#allocation5 + $0x1a8] sm:$0xff]
        %v285 = vld [vmem:[#allocation5 + $0x1b0] sm:$0xff]
        %v286 = vld [vmem:[#allocation5 + $0x1b8] sm:$0xff]
        %v287 = vld [vmem:[#allocation5 + $0x1c0] sm:$0xff]
        %v288 = vld [vmem:[#allocation5 + $0x1c8] sm:$0xff]
        %v289 = vld [vmem:[#allocation5 + $0x1d0] sm:$0xff]
        %v290 = vld [vmem:[#allocation5 + $0x1d8] sm:$0xff]
        %v291 = vld [vmem:[#allocation5 + $0x1e0] sm:$0xff]
        %v292 = vld [vmem:[#allocation5 + $0x1e8] sm:$0xff]
        %v293 = vld [vmem:[#allocation5 + $0x1f0] sm:$0xff]
        %v294 = vld [vmem:[#allocation5 + $0x1f8] sm:$0xff]
        %v295 = vld [vmem:[#allocation5 + $0x200] sm:$0xff]
        %v296 = vld [vmem:[#allocation5 + $0x208] sm:$0xff]
        %v297 = vld [vmem:[#allocation5 + $0x210] sm:$0xff]
        %v298 = vld [vmem:[#allocation5 + $0x218] sm:$0xff]
        %v299 = vld [vmem:[#allocation5 + $0x220] sm:$0xff]
        %v300 = vld [vmem:[#allocation5 + $0x228] sm:$0xff]
        %v301 = vld [vmem:[#allocation5 + $0x230] sm:$0xff]
        %v302 = vld [vmem:[#allocation5 + $0x238] sm:$0xff]
        %v303 = vld [vmem:[#allocation5 + $0x240] sm:$0xff]
        %v304 = vld [vmem:[#allocation5 + $0x248] sm:$0xff]
        %v305 = vld [vmem:[#allocation5 + $0x250] sm:$0xff]
        %v306 = vld [vmem:[#allocation5 + $0x258] sm:$0xff]
        %v307 = vld [vmem:[#allocation5 + $0x260] sm:$0xff]
        %v308 = vld [vmem:[#allocation5 + $0x268] sm:$0xff]
        %v309 = vld [vmem:[#allocation5 + $0x270] sm:$0xff]
        %v310 = vld [vmem:[#allocation5 + $0x278] sm:$0xff]
        %v311 = vld [vmem:[#allocation5 + $0x280] sm:$0xff]
        %v312 = vld [vmem:[#allocation5 + $0x288] sm:$0xff]
        %v313 = vld [vmem:[#allocation5 + $0x290] sm:$0xff]
        %v314 = vld [vmem:[#allocation5 + $0x298] sm:$0xff]
        %v315 = vld [vmem:[#allocation5 + $0x2a0] sm:$0xff]
        %v316 = vld [vmem:[#allocation5 + $0x2a8] sm:$0xff]
        %v317 = vld [vmem:[#allocation5 + $0x2b0] sm:$0xff]
        %v318 = vld [vmem:[#allocation5 + $0x2b8] sm:$0xff]
        %v319 = vld [vmem:[#allocation5 + $0x2c0] sm:$0xff]
        %v320 = vld [vmem:[#allocation5 + $0x2c8] sm:$0xff]
        %v321 = vld [vmem:[#allocation5 + $0x2d0] sm:$0xff]
        %v322 = vld [vmem:[#allocation5 + $0x2d8] sm:$0xff]
        %v323 = vld [vmem:[#allocation5 + $0x2e0] sm:$0xff]
        %v324 = vld [vmem:[#allocation5 + $0x2e8] sm:$0xff]
        %v325 = vld [vmem:[#allocation5 + $0x2f0] sm:$0xff]
        %v326 = vld [vmem:[#allocation5 + $0x2f8] sm:$0xff]
        %v327 = vld [vmem:[#allocation5 + $0x300] sm:$0xff]
        %v328 = vld [vmem:[#allocation5 + $0x308] sm:$0xff]
        %v329 = vld [vmem:[#allocation5 + $0x310] sm:$0xff]
        %v330 = vld [vmem:[#allocation5 + $0x318] sm:$0xff]
        %v331 = vld [vmem:[#allocation5 + $0x320] sm:$0xff]
        %v332 = vld [vmem:[#allocation5 + $0x328] sm:$0xff]
        %v333 = vld [vmem:[#allocation5 + $0x330] sm:$0xff]
        %v334 = vld [vmem:[#allocation5 + $0x338] sm:$0xff]
        %v335 = vld [vmem:[#allocation5 + $0x340] sm:$0xff]
        %v336 = vld [vmem:[#allocation5 + $0x348] sm:$0xff]
        %v337 = vld [vmem:[#allocation5 + $0x350] sm:$0xff]
        %v338 = vld [vmem:[#allocation5 + $0x358] sm:$0xff]
        %v339 = vld [vmem:[#allocation5 + $0x360] sm:$0xff]
        %v340 = vld [vmem:[#allocation5 + $0x368] sm:$0xff]
        %v341 = vld [vmem:[#allocation5 + $0x370] sm:$0xff]
        %v342 = vld [vmem:[#allocation5 + $0x378] sm:$0xff]
        %v343 = vld [vmem:[#allocation5 + $0x380] sm:$0xff]
        %v344 = vld [vmem:[#allocation5 + $0x388] sm:$0xff]
        %v345 = vld [vmem:[#allocation5 + $0x390] sm:$0xff]
        %v346 = vld [vmem:[#allocation5 + $0x398] sm:$0xff]
        %v347 = vld [vmem:[#allocation5 + $0x3a0] sm:$0xff]
        %v348 = vld [vmem:[#allocation5 + $0x3a8] sm:$0xff]
        %v349 = vld [vmem:[#allocation5 + $0x3b0] sm:$0xff]
        %v350 = vld [vmem:[#allocation5 + $0x3b8] sm:$0xff]
        %v351 = vld [vmem:[#allocation5 + $0x3c0] sm:$0xff]
        %v352 = vld [vmem:[#allocation5 + $0x3c8] sm:$0xff]
        %v353 = vld [vmem:[#allocation5 + $0x3d0] sm:$0xff]
        %v354 = vld [vmem:[#allocation5 + $0x3d8] sm:$0xff]
        %v355 = vld [vmem:[#allocation5 + $0x3e0] sm:$0xff]
        %v356 = vld [vmem:[#allocation5 + $0x3e8] sm:$0xff]
        %v357 = vld [vmem:[#allocation5 + $0x3f0] sm:$0xff]
        %v358 = vld [vmem:[#allocation5 + $0x3f8] sm:$0xff]
        %v359 = vld [vmem:[#allocation5 + $0x400] sm:$0xff]
        %v360 = vld [vmem:[#allocation5 + $0x408] sm:$0xff]
        %v361 = vld [vmem:[#allocation5 + $0x410] sm:$0xff]
        %v362 = vld [vmem:[#allocation5 + $0x418] sm:$0xff]
        %v363 = vld [vmem:[#allocation5 + $0x420] sm:$0xff]
        %v364 = vld [vmem:[#allocation5 + $0x428] sm:$0xff]
        %v365 = vld [vmem:[#allocation5 + $0x430] sm:$0xff]
        %v366 = vld [vmem:[#allocation5 + $0x438] sm:$0xff]
        %v367 = vld [vmem:[#allocation5 + $0x440] sm:$0xff]
        %v368 = vld [vmem:[#allocation5 + $0x448] sm:$0xff]
        %v369 = vld [vmem:[#allocation5 + $0x450] sm:$0xff]
        %v370 = vld [vmem:[#allocation5 + $0x458] sm:$0xff]
        %v371 = vld [vmem:[#allocation5 + $0x460] sm:$0xff]
        %v372 = vld [vmem:[#allocation5 + $0x468] sm:$0xff]
        %v373 = vld [vmem:[#allocation5 + $0x470] sm:$0xff]
        %v374 = vld [vmem:[#allocation5 + $0x478] sm:$0xff]
        %375 = vmatprep.subr.mxu0 0.0
        %376 = vmatpush1.msra.mxu0 %v246
        %377 = vmatprep.subr.mxu0 0.0
        %378 = vmatpush1.msra.mxu0 %v245
        %379 = vmatprep.subr.mxu0 0.0
        %380 = vmatpush1.msra.mxu0 %v244
        %381 = vmatprep.subr.mxu0 0.0
        %382 = vmatpush1.msra.mxu0 %v243
        %383 = vmatprep.subr.mxu0 0.0
        %384 = vmatpush1.msra.mxu0 %v242
        %385 = vmatprep.subr.mxu0 0.0
        %386 = vmatpush1.msra.mxu0 %v241
        %387 = vmatprep.subr.mxu0 0.0
        %388 = vmatpush1.msra.mxu0 %v240
        %389 = vmatprep.subr.mxu0 0.0
        %390 = vmatpush1.msra.mxu0 %v239
        %391 = vmatprep.subr.mxu0 0.0
        %392 = vmatpush1.msra.mxu0 %v238
        %393 = vmatprep.subr.mxu0 0.0
        %394 = vmatpush1.msra.mxu0 %v237
        %395 = vmatprep.subr.mxu0 0.0
        %396 = vmatpush1.msra.mxu0 %v236
        %397 = vmatprep.subr.mxu0 0.0
        %398 = vmatpush1.msra.mxu0 %v235
        %399 = vmatprep.subr.mxu0 0.0
        %400 = vmatpush1.msra.mxu0 %v234
        %401 = vmatprep.subr.mxu0 0.0
        %402 = vmatpush1.msra.mxu0 %v233
        %403 = vmatprep.subr.mxu0 0.0
        %404 = vmatpush1.msra.mxu0 %v232
        %405 = vmatprep.subr.mxu0 0.0
        %406 = vmatpush1.msra.mxu0 %v231
        %407 = vmatprep.subr.mxu0 0.0
        %408 = vmatpush2.msra.mxu0 %v262
        %409 = vmatprep.subr.mxu0 0.0
        %410 = vmatpush2.msra.mxu0 %v261
        %411 = vmatprep.subr.mxu0 0.0
        %412 = vmatpush2.msra.mxu0 %v260
        %413 = vmatprep.subr.mxu0 0.0
        %414 = vmatpush2.msra.mxu0 %v259
        %415 = vmatprep.subr.mxu0 0.0
        %416 = vmatpush2.msra.mxu0 %v258
        %417 = vmatprep.subr.mxu0 0.0
        %418 = vmatpush2.msra.mxu0 %v257
        %419 = vmatprep.subr.mxu0 0.0
        %420 = vmatpush2.msra.mxu0 %v256
        %421 = vmatprep.subr.mxu0 0.0
        %422 = vmatpush2.msra.mxu0 %v255
        %423 = vmatprep.subr.mxu0 0.0
        %424 = vmatpush2.msra.mxu0 %v254
        %425 = vmatprep.subr.mxu0 0.0
        %426 = vmatpush2.msra.mxu0 %v253
        %427 = vmatprep.subr.mxu0 0.0
        %428 = vmatpush2.msra.mxu0 %v252
        %429 = vmatprep.subr.mxu0 0.0
        %430 = vmatpush2.msra.mxu0 %v251
        %431 = vmatprep.subr.mxu0 0.0
        %432 = vmatpush2.msra.mxu0 %v250
        %433 = vmatprep.subr.mxu0 0.0
        %434 = vmatpush2.msra.mxu0 %v249
        %435 = vmatprep.subr.mxu0 0.0
        %436 = vmatpush2.msra.mxu0 %v248
        %437 = vmatprep.subr.mxu0 0.0
        %438 = vmatpush2.msra.mxu0 %v247
        %439 = vmatprep.mubr.f32.mxu0 %v188
        %440 = vmatmul.mubr.f32.gmra.mxu0 %v182
        %v441 = vpop.f32.mrf.mxu0
        %v442 = vadd.f32 0.0, %v441
        %v443 = vpop.f32.mrf.mxu0
        %444 = vdwg.mxu0
        %445 = vmatprep.subr.mxu0 0.0
        %446 = vmatpush1.msra.mxu0 %v278
        %447 = vmatprep.subr.mxu0 0.0
        %448 = vmatpush1.msra.mxu0 %v277
        %449 = vmatprep.subr.mxu0 0.0
        %450 = vmatpush1.msra.mxu0 %v276
        %451 = vmatprep.subr.mxu0 0.0
        %452 = vmatpush1.msra.mxu0 %v275
        %453 = vmatprep.subr.mxu0 0.0
        %454 = vmatpush1.msra.mxu0 %v274
        %455 = vmatprep.subr.mxu0 0.0
        %456 = vmatpush1.msra.mxu0 %v273
        %457 = vmatprep.subr.mxu0 0.0
        %458 = vmatpush1.msra.mxu0 %v272
        %459 = vmatprep.subr.mxu0 0.0
        %460 = vmatpush1.msra.mxu0 %v271
        %461 = vmatprep.subr.mxu0 0.0
        %462 = vmatpush1.msra.mxu0 %v270
        %463 = vmatprep.subr.mxu0 0.0
        %464 = vmatpush1.msra.mxu0 %v269
        %465 = vmatprep.subr.mxu0 0.0
        %466 = vmatpush1.msra.mxu0 %v268
        %467 = vmatprep.subr.mxu0 0.0
        %468 = vmatpush1.msra.mxu0 %v267
        %469 = vmatprep.subr.mxu0 0.0
        %470 = vmatpush1.msra.mxu0 %v266
        %471 = vmatprep.subr.mxu0 0.0
        %472 = vmatpush1.msra.mxu0 %v265
        %473 = vmatprep.subr.mxu0 0.0
        %474 = vmatpush1.msra.mxu0 %v264
        %475 = vmatprep.subr.mxu0 0.0
        %476 = vmatpush1.msra.mxu0 %v263
        %477 = vmatprep.subr.mxu0 0.0
        %478 = vmatpush2.msra.mxu0 %v294
        %479 = vmatprep.subr.mxu0 0.0
        %480 = vmatpush2.msra.mxu0 %v293
        %481 = vmatprep.subr.mxu0 0.0
        %482 = vmatpush2.msra.mxu0 %v292
        %483 = vmatprep.subr.mxu0 0.0
        %484 = vmatpush2.msra.mxu0 %v291
        %485 = vmatprep.subr.mxu0 0.0
        %486 = vmatpush2.msra.mxu0 %v290
        %487 = vmatprep.subr.mxu0 0.0
        %488 = vmatpush2.msra.mxu0 %v289
        %489 = vmatprep.subr.mxu0 0.0
        %490 = vmatpush2.msra.mxu0 %v288
        %491 = vmatprep.subr.mxu0 0.0
        %492 = vmatpush2.msra.mxu0 %v287
        %493 = vmatprep.subr.mxu0 0.0
        %494 = vmatpush2.msra.mxu0 %v286
        %495 = vmatprep.subr.mxu0 0.0
        %496 = vmatpush2.msra.mxu0 %v285
        %497 = vmatprep.subr.mxu0 0.0
        %498 = vmatpush2.msra.mxu0 %v284
        %499 = vmatprep.subr.mxu0 0.0
        %500 = vmatpush2.msra.mxu0 %v283
        %501 = vmatprep.subr.mxu0 0.0
        %502 = vmatpush2.msra.mxu0 %v282
        %503 = vmatprep.subr.mxu0 0.0
        %504 = vmatpush2.msra.mxu0 %v281
        %505 = vmatprep.subr.mxu0 0.0
        %506 = vmatpush2.msra.mxu0 %v280
        %507 = vmatprep.subr.mxu0 0.0
        %508 = vmatpush2.msra.mxu0 %v279
        %509 = vmatprep.mubr.f32.mxu0 %v200
        %510 = vmatmul.mubr.f32.gmra.mxu0 %v194
        %v511 = vpop.f32.mrf.mxu0
        %v512 = vadd.f32 %v442, %v511
        %v513 = vpop.f32.mrf.mxu0
        %514 = vdwg.mxu0
        %515 = vmatprep.subr.mxu0 0.0
        %516 = vmatpush1.msra.mxu0 %v310
        %517 = vmatprep.subr.mxu0 0.0
        %518 = vmatpush1.msra.mxu0 %v309
        %519 = vmatprep.subr.mxu0 0.0
        %520 = vmatpush1.msra.mxu0 %v308
        %521 = vmatprep.subr.mxu0 0.0
        %522 = vmatpush1.msra.mxu0 %v307
        %523 = vmatprep.subr.mxu0 0.0
        %524 = vmatpush1.msra.mxu0 %v306
        %525 = vmatprep.subr.mxu0 0.0
        %526 = vmatpush1.msra.mxu0 %v305
        %527 = vmatprep.subr.mxu0 0.0
        %528 = vmatpush1.msra.mxu0 %v304
        %529 = vmatprep.subr.mxu0 0.0
        %530 = vmatpush1.msra.mxu0 %v303
        %531 = vmatprep.subr.mxu0 0.0
        %532 = vmatpush1.msra.mxu0 %v302
        %533 = vmatprep.subr.mxu0 0.0
        %534 = vmatpush1.msra.mxu0 %v301
        %535 = vmatprep.subr.mxu0 0.0
        %536 = vmatpush1.msra.mxu0 %v300
        %537 = vmatprep.subr.mxu0 0.0
        %538 = vmatpush1.msra.mxu0 %v299
        %539 = vmatprep.subr.mxu0 0.0
        %540 = vmatpush1.msra.mxu0 %v298
        %541 = vmatprep.subr.mxu0 0.0
        %542 = vmatpush1.msra.mxu0 %v297
        %543 = vmatprep.subr.mxu0 0.0
        %544 = vmatpush1.msra.mxu0 %v296
        %545 = vmatprep.subr.mxu0 0.0
        %546 = vmatpush1.msra.mxu0 %v295
        %547 = vmatprep.subr.mxu0 0.0
        %548 = vmatpush2.msra.mxu0 %v326
        %549 = vmatprep.subr.mxu0 0.0
        %550 = vmatpush2.msra.mxu0 %v325
        %551 = vmatprep.subr.mxu0 0.0
        %552 = vmatpush2.msra.mxu0 %v324
        %553 = vmatprep.subr.mxu0 0.0
        %554 = vmatpush2.msra.mxu0 %v323
        %555 = vmatprep.subr.mxu0 0.0
        %556 = vmatpush2.msra.mxu0 %v322
        %557 = vmatprep.subr.mxu0 0.0
        %558 = vmatpush2.msra.mxu0 %v321
        %559 = vmatprep.subr.mxu0 0.0
        %560 = vmatpush2.msra.mxu0 %v320
        %561 = vmatprep.subr.mxu0 0.0
        %562 = vmatpush2.msra.mxu0 %v319
        %563 = vmatprep.subr.mxu0 0.0
        %564 = vmatpush2.msra.mxu0 %v318
        %565 = vmatprep.subr.mxu0 0.0
        %566 = vmatpush2.msra.mxu0 %v317
        %567 = vmatprep.subr.mxu0 0.0
        %568 = vmatpush2.msra.mxu0 %v316
        %569 = vmatprep.subr.mxu0 0.0
        %570 = vmatpush2.msra.mxu0 %v315
        %571 = vmatprep.subr.mxu0 0.0
        %572 = vmatpush2.msra.mxu0 %v314
        %573 = vmatprep.subr.mxu0 0.0
        %574 = vmatpush2.msra.mxu0 %v313
        %575 = vmatprep.subr.mxu0 0.0
        %576 = vmatpush2.msra.mxu0 %v312
        %577 = vmatprep.subr.mxu0 0.0
        %578 = vmatpush2.msra.mxu0 %v311
        %579 = vmatprep.mubr.f32.mxu0 %v212
        %580 = vmatmul.mubr.f32.gmra.mxu0 %v206
        %v581 = vpop.f32.mrf.mxu0
        %v582 = vadd.f32 %v512, %v581
        %v583 = vpop.f32.mrf.mxu0
        %584 = vdwg.mxu0
        %585 = vmatprep.subr.mxu0 0.0
        %586 = vmatpush1.msra.mxu0 %v342
        %587 = vmatprep.subr.mxu0 0.0
        %588 = vmatpush1.msra.mxu0 %v341
        %589 = vmatprep.subr.mxu0 0.0
        %590 = vmatpush1.msra.mxu0 %v340
        %591 = vmatprep.subr.mxu0 0.0
        %592 = vmatpush1.msra.mxu0 %v339
        %593 = vmatprep.subr.mxu0 0.0
        %594 = vmatpush1.msra.mxu0 %v338
        %595 = vmatprep.subr.mxu0 0.0
        %596 = vmatpush1.msra.mxu0 %v337
        %597 = vmatprep.subr.mxu0 0.0
        %598 = vmatpush1.msra.mxu0 %v336
        %599 = vmatprep.subr.mxu0 0.0
        %600 = vmatpush1.msra.mxu0 %v335
        %601 = vmatprep.subr.mxu0 0.0
        %602 = vmatpush1.msra.mxu0 %v334
        %603 = vmatprep.subr.mxu0 0.0
        %604 = vmatpush1.msra.mxu0 %v333
        %605 = vmatprep.subr.mxu0 0.0
        %606 = vmatpush1.msra.mxu0 %v332
        %607 = vmatprep.subr.mxu0 0.0
        %608 = vmatpush1.msra.mxu0 %v331
        %609 = vmatprep.subr.mxu0 0.0
        %610 = vmatpush1.msra.mxu0 %v330
        %611 = vmatprep.subr.mxu0 0.0
        %612 = vmatpush1.msra.mxu0 %v329
        %613 = vmatprep.subr.mxu0 0.0
        %614 = vmatpush1.msra.mxu0 %v328
        %615 = vmatprep.subr.mxu0 0.0
        %616 = vmatpush1.msra.mxu0 %v327
        %617 = vmatprep.subr.mxu0 0.0
        %618 = vmatpush2.msra.mxu0 %v358
        %619 = vmatprep.subr.mxu0 0.0
        %620 = vmatpush2.msra.mxu0 %v357
        %621 = vmatprep.subr.mxu0 0.0
        %622 = vmatpush2.msra.mxu0 %v356
        %623 = vmatprep.subr.mxu0 0.0
        %624 = vmatpush2.msra.mxu0 %v355
        %625 = vmatprep.subr.mxu0 0.0
        %626 = vmatpush2.msra.mxu0 %v354
        %627 = vmatprep.subr.mxu0 0.0
        %628 = vmatpush2.msra.mxu0 %v353
        %629 = vmatprep.subr.mxu0 0.0
        %630 = vmatpush2.msra.mxu0 %v352
        %631 = vmatprep.subr.mxu0 0.0
        %632 = vmatpush2.msra.mxu0 %v351
        %633 = vmatprep.subr.mxu0 0.0
        %634 = vmatpush2.msra.mxu0 %v350
        %635 = vmatprep.subr.mxu0 0.0
        %636 = vmatpush2.msra.mxu0 %v349
        %637 = vmatprep.subr.mxu0 0.0
        %638 = vmatpush2.msra.mxu0 %v348
        %639 = vmatprep.subr.mxu0 0.0
        %640 = vmatpush2.msra.mxu0 %v347
        %641 = vmatprep.subr.mxu0 0.0
        %642 = vmatpush2.msra.mxu0 %v346
        %643 = vmatprep.subr.mxu0 0.0
        %644 = vmatpush2.msra.mxu0 %v345
        %645 = vmatprep.subr.mxu0 0.0
        %646 = vmatpush2.msra.mxu0 %v344
        %647 = vmatprep.subr.mxu0 0.0
        %648 = vmatpush2.msra.mxu0 %v343
        %649 = vmatprep.mubr.f32.mxu0 %v224
        %650 = vmatmul.mubr.f32.gmra.mxu0 %v218
        %v651 = vpop.f32.mrf.mxu0
        %v652 = vadd.f32 %v582, %v651
        %v653 = vpop.f32.mrf.mxu0
        %654 = vdwg.mxu0
        %655 = vmatprep.subr.mxu0 0.0
        %656 = vmatpush1.msra.mxu0 %v374
        %657 = vmatprep.subr.mxu0 0.0
        %658 = vmatpush1.msra.mxu0 %v373
        %659 = vmatprep.subr.mxu0 0.0
        %660 = vmatpush1.msra.mxu0 %v372
        %661 = vmatprep.subr.mxu0 0.0
        %662 = vmatpush1.msra.mxu0 %v371
        %663 = vmatprep.subr.mxu0 0.0
        %664 = vmatpush1.msra.mxu0 %v370
        %665 = vmatprep.subr.mxu0 0.0
        %666 = vmatpush1.msra.mxu0 %v369
        %667 = vmatprep.subr.mxu0 0.0
        %668 = vmatpush1.msra.mxu0 %v368
        %669 = vmatprep.subr.mxu0 0.0
        %670 = vmatpush1.msra.mxu0 %v367
        %671 = vmatprep.subr.mxu0 0.0
        %672 = vmatpush1.msra.mxu0 %v366
        %673 = vmatprep.subr.mxu0 0.0
        %674 = vmatpush1.msra.mxu0 %v365
        %675 = vmatprep.subr.mxu0 0.0
        %676 = vmatpush1.msra.mxu0 %v364
        %677 = vmatprep.subr.mxu0 0.0
        %678 = vmatpush1.msra.mxu0 %v363
        %679 = vmatprep.subr.mxu0 0.0
        %680 = vmatpush1.msra.mxu0 %v362
        %681 = vmatprep.subr.mxu0 0.0
        %682 = vmatpush1.msra.mxu0 %v361
        %683 = vmatprep.subr.mxu0 0.0
        %684 = vmatpush1.msra.mxu0 %v360
        %685 = vmatprep.subr.mxu0 0.0
        %686 = vmatpush1.msra.mxu0 %v359
        %687 = vmatprep.subr.mxu0 0.0
        %688 = vmatpush2.msra.mxu0 0.0
        %689 = vmatprep.subr.mxu0 0.0
        %690 = vmatpush2.msra.mxu0 0.0
        %691 = vmatprep.subr.mxu0 0.0
        %692 = vmatpush2.msra.mxu0 0.0
        %693 = vmatprep.subr.mxu0 0.0
        %694 = vmatpush2.msra.mxu0 0.0
        %695 = vmatprep.subr.mxu0 0.0
        %696 = vmatpush2.msra.mxu0 0.0
        %697 = vmatprep.subr.mxu0 0.0
        %698 = vmatpush2.msra.mxu0 0.0
        %699 = vmatprep.subr.mxu0 0.0
        %700 = vmatpush2.msra.mxu0 0.0
        %701 = vmatprep.subr.mxu0 0.0
        %702 = vmatpush2.msra.mxu0 0.0
        %703 = vmatprep.subr.mxu0 0.0
        %704 = vmatpush2.msra.mxu0 0.0
        %705 = vmatprep.subr.mxu0 0.0
        %706 = vmatpush2.msra.mxu0 0.0
        %707 = vmatprep.subr.mxu0 0.0
        %708 = vmatpush2.msra.mxu0 0.0
        %709 = vmatprep.subr.mxu0 0.0
        %710 = vmatpush2.msra.mxu0 0.0
        %711 = vmatprep.subr.mxu0 0.0
        %712 = vmatpush2.msra.mxu0 0.0
        %713 = vmatprep.subr.mxu0 0.0
        %714 = vmatpush2.msra.mxu0 0.0
        %715 = vmatprep.subr.mxu0 0.0
        %716 = vmatpush2.msra.mxu0 0.0
        %717 = vmatprep.subr.mxu0 0.0
        %718 = vmatpush2.msra.mxu0 0.0
        %719 = vmatprep.mubr.f32.mxu0 0.0
        %720 = vmatmul.mubr.f32.gmra.mxu0 %v230
        %v721 = vpop.f32.mrf.mxu0
        %v722 = vadd.f32 %v652, %v721
        %v723 = vpop.f32.mrf.mxu0
        %724 = vdwg.mxu0
        %725 = vst [vmem:[%s173] sm:$0xff] %v722
        %s726 = sand.u32 %s75, 1
        %s727 = scalar_lea.sflag [#allocation4], %s726
        %s728 = sand.u32 %s75, 1
        %s729 = smul.addr %s728, 8
        %s730 = scalar_lea.vmem [#allocation7], %s729
        // Predicated region
        $region37: #{tpu_custom_call.1} parent=27 // pred_check
          %p731 = pneg %p85
        $region38: #{tpu_custom_call.1} parent=27 // pred_check_branch
          %733 = sbr.rel (%p731) target = $region40
        $region39: #{tpu_custom_call.1} parent=27 // pred_region
          %s735 = ssub.s32 128, 128
          %736 = vsyncadd %s727, %s735
          %s737 = smul.addr %s20, 128
          %s738 = scalar_lea.hbm %s2, %s737
          %s740 = sshll.u32 %s730, 4
          %s741 = int_to_ptr.vmem [resolvable:$true] %s740
          %743 = dma.vmem_to_hbm [thread:$0]  %s741, 128, %s738, %s727
        $region40: #{tpu_custom_call.1} parent=27 // pred_fallthru
          _
      $region28: #{tpu_custom_call.1} parent=5 // pred_fallthru
        _
      %p744 = scmp.le.s32.totalorder 2, %s15
      // Predicated region
      $region41: #{tpu_custom_call.1} parent=5 // pred_check
        %p745 = pneg %p744
      $region42: #{tpu_custom_call.1} parent=5 // pred_check_branch
        %747 = sbr.rel (%p745) target = $region44
      $region43: #{tpu_custom_call.1} parent=5 // pred_region
        %s748 = ssub.s32 %s15, 2
        // Predicated region
        $region45: #{tpu_custom_call.1} parent=43 // pred_check
          %p749 = pneg %p91
        $region46: #{tpu_custom_call.1} parent=43 // pred_check_branch
          %751 = sbr.rel (%p749) target = $region48
        $region47: #{tpu_custom_call.1} parent=43 // pred_region
          %s752 = sand.u32 %s76, 1
          %s753 = scalar_lea.sflag [#allocation4], %s752
          %s754 = sand.u32 %s76, 1
          %s755 = smul.addr %s754, 8
          %s756 = scalar_lea.vmem [#allocation7], %s755
          %757 = dma.done %s753, 128
        $region48: #{tpu_custom_call.1} parent=43 // pred_fallthru
          _
      $region44: #{tpu_custom_call.1} parent=5 // pred_fallthru
        _
    $region6: #{tpu_custom_call.1} parent=1 // loop_footer
      %s19 = sadd.s32 1, %s15
    $region7: #{tpu_custom_call.1} parent=1 // loop_footer_branch
      %14 = sbr.rel target = $region3
    $region8: #{tpu_custom_call.1} parent=1 // loop_exit
      _
    %758 = vsyncpa [#allocation3], 1
    %s759 = scalar_lea.sflag [#allocation3], 1
    %760 = vsyncpa %s759, 1
    %761 = vsyncpa [#allocation6], 1
    %762 = vsyncpa [#allocation4], 1
    %s763 = scalar_lea.sflag [#allocation4], 1
    %764 = vsyncpa %s763, 1

</llo_original>
